<compile_context>
chip_gen: v7x
topology: tpu7x:2x2x1
jax: 0.10.0
libtpu: 0.0.40
codegen_flags: <defaults>
</compile_context>

<pallas_src>
import functools

import jax
import jax.numpy as jnp
from jax.experimental import pallas as pl
from jax.experimental.pallas import tpu as pltpu

N_EMBD = 64
HIDDEN = 4 * N_EMBD      # 256
DROPOUT_P = 0.3


def _ffn_kernel(x_ref, w1_ref, b1_ref, w2_ref, b2_ref, *rest,
                apply_dropout: bool, keep_threshold: int, inv_keep: float):
    # x_ref: (tm, n_embd)   w1_ref: (n_embd, hidden)   b1_ref: (1, hidden)
    # w2_ref: (hidden, n_embd)  b2_ref: (1, n_embd)    o_ref: (tm, n_embd)
    # bits_ref (train only): (tm, n_embd) uint32
    if apply_dropout:
        bits_ref, o_ref = rest
    else:
        (o_ref,) = rest

    # Linear 1 + ReLU (MXU matmul, f32 accumulate; native input dtype).
    h = jnp.dot(x_ref[...], w1_ref[...], preferred_element_type=jnp.float32)
    h = jnp.maximum(h + b1_ref[...], 0.0)

    # Linear 2
    y = jnp.dot(h, w2_ref[...], preferred_element_type=jnp.float32) + b2_ref[...]

    if apply_dropout:
        # Inverted dropout: keep with prob (1-p), scale kept values by 1/(1-p).
        # Integer compare on raw uint32 bits (no float convert / shift needed).
        keep = bits_ref[...] >= jnp.uint32(keep_threshold)
        y = jnp.where(keep, y * jnp.float32(inv_keep), 0.0)

    o_ref[...] = y.astype(o_ref.dtype)


def feed_forward(x, params, *, training: bool = False, rng=None, tm: int = 512):
    """x: (B, T, n_embd) or (N, n_embd). Returns the same shape.

    In training mode, pass a fresh `rng` key every step/microbatch — the
    dropout mask is a deterministic function of the key.
    """
    w1, b1, w2, b2 = params["w1"], params["b1"], params["w2"], params["b2"]

    orig_shape = x.shape
    d = orig_shape[-1]
    x2 = x.reshape(-1, d)                        # (N, n_embd)
    n = x2.shape[0]

    # Effective row tile: as large as requested, but never larger than the
    # (sublane-rounded) token count; pad rows to a multiple of the tile.
    n8 = 8 * pl.cdiv(n, 8)
    tm_eff = min(tm, n8)
    n_pad = tm_eff * pl.cdiv(n, tm_eff)
    if n_pad != n:
        x2 = jnp.pad(x2, ((0, n_pad - n), (0, 0)))

    kernel = functools.partial(
        _ffn_kernel,
        apply_dropout=training,
        keep_threshold=int(DROPOUT_P * (1 << 32)),
        inv_keep=1.0 / (1.0 - DROPOUT_P),
    )

    in_specs = [
        pl.BlockSpec((tm_eff, d), lambda i: (i, 0)),      # x tile
        pl.BlockSpec((d, HIDDEN), lambda i: (0, 0)),      # W1 (resident)
        pl.BlockSpec((1, HIDDEN), lambda i: (0, 0)),      # b1
        pl.BlockSpec((HIDDEN, d), lambda i: (0, 0)),      # W2 (resident)
        pl.BlockSpec((1, d), lambda i: (0, 0)),           # b2
    ]
    args = [x2, w1, b1, w2, b2]

    if training:
        if rng is None:
            rng = jax.random.PRNGKey(0)
        bits = jax.random.bits(rng, (n_pad, d), dtype=jnp.uint32)
        in_specs.append(pl.BlockSpec((tm_eff, d), lambda i: (i, 0)))
        args.append(bits)

    out = pl.pallas_call(
        kernel,
        out_shape=jax.ShapeDtypeStruct((n_pad, d), x2.dtype),
        grid_spec=pltpu.PrefetchScalarGridSpec(
            num_scalar_prefetch=0,
            grid=(n_pad // tm_eff,),
            in_specs=in_specs,
            out_specs=pl.BlockSpec((tm_eff, d), lambda i: (i, 0)),
        ),
        compiler_params=pltpu.CompilerParams(
            # Grid steps are fully independent -> shard across TCs on v7x.
            dimension_semantics=("parallel",)),
    )(*args)

    return out[:n].reshape(orig_shape)


def init_params(key, n_embd=N_EMBD):
    """Deterministic parameters, shapes matching nn.Linear (stored transposed)."""
    k1, k2, k3, k4 = jax.random.split(key, 4)
    hidden = 4 * n_embd
    # PyTorch Linear default init: U(-1/sqrt(fan_in), 1/sqrt(fan_in))
    lim1 = 1.0 / jnp.sqrt(n_embd)
    lim2 = 1.0 / jnp.sqrt(hidden)
    return {
        "w1": jax.random.uniform(k1, (n_embd, hidden), jnp.float32, -lim1, lim1),
        "b1": jax.random.uniform(k2, (1, hidden), jnp.float32, -lim1, lim1),
        "w2": jax.random.uniform(k3, (hidden, n_embd), jnp.float32, -lim2, lim2),
        "b2": jax.random.uniform(k4, (1, n_embd), jnp.float32, -lim2, lim2),
    }


def _reference_eval(x, params):
    """Plain-JAX reference (eval mode: dropout is identity)."""
    h = jnp.maximum(x @ params["w1"] + params["b1"], 0.0)
    return h @ params["w2"] + params["b2"]


if __name__ == "__main__":
    key = jax.random.PRNGKey(0)
    pkey, xkey, dkey = jax.random.split(key, 3)

    params = init_params(pkey)
    B, T = 2, 8
    x = jax.random.normal(xkey, (B, T, N_EMBD), dtype=jnp.float32)

    # Eval mode (dropout = identity): check against plain-JAX reference.
    y_eval = feed_forward(x, params, training=False)
    y_eval = jax.block_until_ready(y_eval)
    y_ref = _reference_eval(x.reshape(-1, N_EMBD), params).reshape(x.shape)
    assert y_eval.shape == x.shape
    assert jnp.allclose(y_eval, y_ref, atol=1e-5, rtol=1e-5)

    # Train mode: inverted dropout (p=0.3). Every surviving element must equal
    # the eval output scaled by 1/(1-p); dropped elements are exactly zero.
    y_train = feed_forward(x, params, training=True, rng=dkey)
    y_train = jax.block_until_ready(y_train)
    assert y_train.shape == x.shape
    scaled = y_ref / (1.0 - DROPOUT_P)
    ok = jnp.where(y_train == 0.0, True,
                   jnp.isclose(y_train, scaled, atol=1e-5, rtol=1e-5))
    assert bool(jnp.all(ok))

    print("KERNEL_OK")
</pallas_src>

<mosaic_0001>
module attributes {stable_mosaic.version = 11 : i64} {
  func.func @_ffn_kernel(%arg0: i32, %arg1: memref<16x64xf32, #tpu.memory_space<vmem>>, %arg2: memref<64x256xf32, #tpu.memory_space<vmem>>, %arg3: memref<1x256xf32, #tpu.memory_space<vmem>>, %arg4: memref<256x64xf32, #tpu.memory_space<vmem>>, %arg5: memref<1x64xf32, #tpu.memory_space<vmem>>, %arg6: memref<16x64xf32, #tpu.memory_space<vmem>>) attributes {dimension_semantics = [#tpu.dimension_semantics<parallel>], iteration_bounds = array<i64: 1>, scalar_prefetch = 0 : i64, scratch_operands = 0 : i64, tpu.core_type = #tpu.core_type<tc>, window_params = [{transform_indices = @transform_0, window_bounds = array<i64: 16, 64>}, {pipeline_mode = #tpu.pipeline_mode<synchronous>, transform_indices = @transform_1, window_bounds = array<i64: 64, 256>}, {pipeline_mode = #tpu.pipeline_mode<synchronous>, transform_indices = @transform_2, window_bounds = array<i64: 1, 256>}, {pipeline_mode = #tpu.pipeline_mode<synchronous>, transform_indices = @transform_3, window_bounds = array<i64: 256, 64>}, {pipeline_mode = #tpu.pipeline_mode<synchronous>, transform_indices = @transform_4, window_bounds = array<i64: 1, 64>}, {transform_indices = @transform_5, window_bounds = array<i64: 16, 64>}]} {
    %c0 = arith.constant 0 : index
    %c0_0 = arith.constant 0 : index
    %0 = vector.load %arg1[%c0, %c0_0] : memref<16x64xf32, #tpu.memory_space<vmem>>, vector<16x64xf32>
    %c0_1 = arith.constant 0 : index
    %c0_2 = arith.constant 0 : index
    %1 = vector.load %arg2[%c0_1, %c0_2] : memref<64x256xf32, #tpu.memory_space<vmem>>, vector<64x256xf32>
    %cst = arith.constant dense<0.000000e+00> : vector<16x256xf32>
    %2 = tpu.matmul %0, %1, %cst {dimension_numbers = #tpu.dot_dimension_numbers<[1], [0], [0], [1], [0, 0, 1, 1], [], []>} : vector<16x64xf32>, vector<64x256xf32>, vector<16x256xf32> -> vector<16x256xf32>
    %c0_3 = arith.constant 0 : index
    %c0_4 = arith.constant 0 : index
    %3 = vector.load %arg3[%c0_3, %c0_4] : memref<1x256xf32, #tpu.memory_space<vmem>>, vector<1x256xf32>
    %4 = vector.broadcast %3 : vector<1x256xf32> to vector<16x256xf32>
    %5 = arith.addf %2, %4 : vector<16x256xf32>
    %cst_5 = arith.constant 0.000000e+00 : f32
    %6 = vector.broadcast %cst_5 : f32 to vector<16x256xf32>
    %7 = arith.maximumf %5, %6 : vector<16x256xf32>
    %c0_6 = arith.constant 0 : index
    %c0_7 = arith.constant 0 : index
    %8 = vector.load %arg4[%c0_6, %c0_7] : memref<256x64xf32, #tpu.memory_space<vmem>>, vector<256x64xf32>
    %cst_8 = arith.constant dense<0.000000e+00> : vector<16x64xf32>
    %9 = tpu.matmul %7, %8, %cst_8 {dimension_numbers = #tpu.dot_dimension_numbers<[1], [0], [0], [1], [0, 0, 1, 1], [], []>} : vector<16x256xf32>, vector<256x64xf32>, vector<16x64xf32> -> vector<16x64xf32>
    %c0_9 = arith.constant 0 : index
    %c0_10 = arith.constant 0 : index
    %10 = vector.load %arg5[%c0_9, %c0_10] : memref<1x64xf32, #tpu.memory_space<vmem>>, vector<1x64xf32>
    %11 = vector.broadcast %10 : vector<1x64xf32> to vector<16x64xf32>
    %12 = arith.addf %9, %11 : vector<16x64xf32>
    %c0_11 = arith.constant 0 : index
    %c0_12 = arith.constant 0 : index
    %13 = vector.load %arg6[%c0_11, %c0_12] : memref<16x64xf32, #tpu.memory_space<vmem>>, vector<16x64xf32>
    tpu.vector_store %arg6[%c0_11, %c0_12], %12 {strides = array<i32>} : memref<16x64xf32, #tpu.memory_space<vmem>>, vector<16x64xf32>,
    return
  }
  func.func @transform_0(%arg0: i32) -> (i32, i32) {
    %c0_i32 = arith.constant 0 : i32
    %c0_i32_0 = arith.constant 0 : i32
    return %arg0, %c0_i32 : i32, i32
  }
  func.func @transform_1(%arg0: i32) -> (i32, i32) {
    %c0_i32 = arith.constant 0 : i32
    %c0_i32_0 = arith.constant 0 : i32
    %c0_i32_1 = arith.constant 0 : i32
    return %c0_i32, %c0_i32_0 : i32, i32
  }
  func.func @transform_2(%arg0: i32) -> (i32, i32) {
    %c0_i32 = arith.constant 0 : i32
    %c0_i32_0 = arith.constant 0 : i32
    %c0_i32_1 = arith.constant 0 : i32
    return %c0_i32, %c0_i32_0 : i32, i32
  }
  func.func @transform_3(%arg0: i32) -> (i32, i32) {
    %c0_i32 = arith.constant 0 : i32
    %c0_i32_0 = arith.constant 0 : i32
    %c0_i32_1 = arith.constant 0 : i32
    return %c0_i32, %c0_i32_0 : i32, i32
  }
  func.func @transform_4(%arg0: i32) -> (i32, i32) {
    %c0_i32 = arith.constant 0 : i32
    %c0_i32_0 = arith.constant 0 : i32
    %c0_i32_1 = arith.constant 0 : i32
    return %c0_i32, %c0_i32_0 : i32, i32
  }
  func.func @transform_5(%arg0: i32) -> (i32, i32) {
    %c0_i32 = arith.constant 0 : i32
    %c0_i32_0 = arith.constant 0 : i32
    return %arg0, %c0_i32 : i32, i32
  }
}

</mosaic_0001>

<llo_original>
// kernel: tpu_custom_call.1
$region0: #{tpu_custom_call.1}
  #allocation0 [shape = 'u32[]', space=smem, size = 0x4, offset = 0x4, fixed_abs, tag = 'smem constant byte address 0x4 - core index']
  #allocation1 [shape = 'u32[144,128]{1,0:T(1,128)}', space=vmem, size = 0x12000, scoped, tag = 'internal scratch']
  %s0 = inlined_call_operand.vmem [shape: f32[16,64], index: 0, kind: input, shape index: {}]
  %s1 = inlined_call_operand.vmem [shape: f32[64,256], index: 1, kind: input, shape index: {}]
  %s2 = inlined_call_operand.vmem [shape: f32[1,256], index: 2, kind: input, shape index: {}]
  %s3 = inlined_call_operand.vmem [shape: f32[256,64], index: 3, kind: input, shape index: {}]
  %s4 = inlined_call_operand.vmem [shape: f32[1,64], index: 4, kind: input, shape index: {}]
  %s5 = inlined_call_operand.hbm [shape: f32[16,64], index: 5, kind: output, shape index: {}]
  %s6 = sld [smem:[#allocation0]]
  $region30: #{tpu_custom_call.1} parent=0
    _
  %s8 = ssub.s32 1, %s6
  %s9 = scalar_select 0, %s8, %s6
  $region1: #{tpu_custom_call.1} parent=0
    #allocation2 [shape = 'u8[8192]{0}', space=vmem, size = 0x2000, scoped, tag = 'output window, operand 0, single buffered']
    #allocation3 [shape = 's32[1]{0}', space=sflag, size = 0x4, scoped, tag = 'scoped memory for tpu_custom_call.1']
    %10 = vsyncpa [#allocation3], 0
    // Predicated region
    $region2: #{tpu_custom_call.1} parent=1 // pred_check
      _
    $region3: #{tpu_custom_call.1} parent=1 // pred_check_branch
      %12 = sbr.rel (0) target = $region5
    $region4: #{tpu_custom_call.1} parent=1 // pred_region
      _
    $region5: #{tpu_custom_call.1} parent=1 // pred_fallthru
      _
    // Predicated region
    $region6: #{tpu_custom_call.1} parent=1 // pred_check
      _
    $region7: #{tpu_custom_call.1} parent=1 // pred_check_branch
      %14 = sbr.rel (0) target = $region9
    $region8: #{tpu_custom_call.1} parent=1 // pred_region
      _
    $region9: #{tpu_custom_call.1} parent=1 // pred_fallthru
      _
    // Predicated region
    $region10: #{tpu_custom_call.1} parent=1 // pred_check
      _
    $region11: #{tpu_custom_call.1} parent=1 // pred_check_branch
      %16 = sbr.rel (0) target = $region13
    $region12: #{tpu_custom_call.1} parent=1 // pred_region
      _
    $region13: #{tpu_custom_call.1} parent=1 // pred_fallthru
      _
    // Predicated region
    $region14: #{tpu_custom_call.1} parent=1 // pred_check
      _
    $region15: #{tpu_custom_call.1} parent=1 // pred_check_branch
      %18 = sbr.rel (0) target = $region17
    $region16: #{tpu_custom_call.1} parent=1 // pred_region
      _
    $region17: #{tpu_custom_call.1} parent=1 // pred_fallthru
      _
    // Predicated region
    $region18: #{tpu_custom_call.1} parent=1 // pred_check
      _
    $region19: #{tpu_custom_call.1} parent=1 // pred_check_branch
      %20 = sbr.rel (0) target = $region21
    $region20: #{tpu_custom_call.1} parent=1 // pred_region
      _
    $region21: #{tpu_custom_call.1} parent=1 // pred_fallthru
      _
    %v21 = vld [vmem:[%s0] sm:$0xff]
    %v22 = vld [vmem:[%s0 + $0x8] sm:$0xff]
    %v23 = vld [vmem:[%s1] sm:$0xff]
    %v24 = vld [vmem:[%s1 + $0x8] sm:$0xff]
    %v25 = vld [vmem:[%s1 + $0x10] sm:$0xff]
    %v26 = vld [vmem:[%s1 + $0x18] sm:$0xff]
    %v27 = vld [vmem:[%s1 + $0x20] sm:$0xff]
    %v28 = vld [vmem:[%s1 + $0x28] sm:$0xff]
    %v29 = vld [vmem:[%s1 + $0x30] sm:$0xff]
    %v30 = vld [vmem:[%s1 + $0x38] sm:$0xff]
    %v31 = vld [vmem:[%s1 + $0x40] sm:$0xff]
    %v32 = vld [vmem:[%s1 + $0x48] sm:$0xff]
    %v33 = vld [vmem:[%s1 + $0x50] sm:$0xff]
    %v34 = vld [vmem:[%s1 + $0x58] sm:$0xff]
    %v35 = vld [vmem:[%s1 + $0x60] sm:$0xff]
    %v36 = vld [vmem:[%s1 + $0x68] sm:$0xff]
    %v37 = vld [vmem:[%s1 + $0x70] sm:$0xff]
    %v38 = vld [vmem:[%s1 + $0x78] sm:$0xff]
    %v39 = vld [vmem:[%s2] sm:$0x3]
    %v41 = vlaneseq
    %v42 = vshrl.u32 %v41, 7
    %v43 = vsub.s32 0, %v42
    %v44 = vrot.slane %v39, %v43
    %v45 = vlaneseq
    %v46 = vshrl.u32 %v45, 7
    %v47 = vsub.s32 1, %v46
    %v48 = vrot.slane %v39, %v47
    %vm51 = vcmask 523264
    %v53 = vsel %vm51, %v21, 0
    %v56 = vsel %vm51, %v22, 0
    %58 = vmatprep.subr.mxu0 %v24
    %59 = vmatpush1.msra.mxu0 %v23
    %60 = vmatprep.subr.mxu0 %v26
    %61 = vmatpush1.msra.mxu0 %v25
    %62 = vmatprep.subr.mxu0 %v28
    %63 = vmatpush1.msra.mxu0 %v27
    %64 = vmatprep.subr.mxu0 %v30
    %65 = vmatpush1.msra.mxu0 %v29
    %66 = vmatprep.subr.mxu0 %v32
    %67 = vmatpush1.msra.mxu0 %v31
    %68 = vmatprep.subr.mxu0 %v34
    %69 = vmatpush1.msra.mxu0 %v33
    %70 = vmatprep.subr.mxu0 %v36
    %71 = vmatpush1.msra.mxu0 %v35
    %72 = vmatprep.subr.mxu0 %v38
    %73 = vmatpush1.msra.mxu0 %v37
    %74 = vmatprep.subr.mxu0 0.0
    %75 = vmatpush1.msra.mxu0 0.0
    %76 = vmatprep.subr.mxu0 0.0
    %77 = vmatpush1.msra.mxu0 0.0
    %78 = vmatprep.subr.mxu0 0.0
    %79 = vmatpush1.msra.mxu0 0.0
    %80 = vmatprep.subr.mxu0 0.0
    %81 = vmatpush1.msra.mxu0 0.0
    %82 = vmatprep.subr.mxu0 0.0
    %83 = vmatpush1.msra.mxu0 0.0
    %84 = vmatprep.subr.mxu0 0.0
    %85 = vmatpush1.msra.mxu0 0.0
    %86 = vmatprep.subr.mxu0 0.0
    %87 = vmatpush1.msra.mxu0 0.0
    %88 = vmatprep.subr.mxu0 0.0
    %89 = vmatpush1.msra.mxu0 0.0
    %90 = vmatprep.subr.mxu0 0.0
    %91 = vmatpush1.msra.mxu0 0.0
    %92 = vmatprep.subr.mxu0 0.0
    %93 = vmatpush1.msra.mxu0 0.0
    %94 = vmatprep.subr.mxu0 0.0
    %95 = vmatpush1.msra.mxu0 0.0
    %96 = vmatprep.subr.mxu0 0.0
    %97 = vmatpush1.msra.mxu0 0.0
    %98 = vmatprep.subr.mxu0 0.0
    %99 = vmatpush1.msra.mxu0 0.0
    %100 = vmatprep.subr.mxu0 0.0
    %101 = vmatpush1.msra.mxu0 0.0
    %102 = vmatprep.subr.mxu0 0.0
    %103 = vmatpush1.msra.mxu0 0.0
    %104 = vmatprep.subr.mxu0 0.0
    %105 = vmatpush1.msra.mxu0 0.0
    %106 = vmatprep.subr.mxu0 0.0
    %107 = vmatpush1.msra.mxu0 0.0
    %108 = vmatprep.subr.mxu0 0.0
    %109 = vmatpush1.msra.mxu0 0.0
    %110 = vmatprep.subr.mxu0 0.0
    %111 = vmatpush1.msra.mxu0 0.0
    %112 = vmatprep.subr.mxu0 0.0
    %113 = vmatpush1.msra.mxu0 0.0
    %114 = vmatprep.subr.mxu0 0.0
    %115 = vmatpush1.msra.mxu0 0.0
    %116 = vmatprep.subr.mxu0 0.0
    %117 = vmatpush1.msra.mxu0 0.0
    %118 = vmatprep.subr.mxu0 0.0
    %119 = vmatpush1.msra.mxu0 0.0
    %120 = vmatprep.subr.mxu0 0.0
    %121 = vmatpush1.msra.mxu0 0.0
    %122 = vmatprep.mubr.f32.mxu0 0.0
    %123 = vmatmul.mubr.f32.gmra.mrb[0].mxu0 %v53
    %v124 = vpop.f32.mrb[0].mxu0
    %v125 = vadd.f32 %v44, %v124
    %v126 = vpop.f32.mrb[0].mxu0
    %v127 = vadd.f32 %v48, %v126
    %128 = vmatprep.mubr.f32.mxu0 0.0
    %129 = vmatmul.mubr.f32.gmra.mrb[0].mxu0 %v56
    %v130 = vpop.f32.mrb[0].mxu0
    %v131 = vadd.f32 %v44, %v130
    %v132 = vpop.f32.mrb[0].mxu0
    %v133 = vadd.f32 %v48, %v132
    %134 = vdwg.mxu0
    %v135 = vmax.f32 %v125, 0.0
    %v136 = vmax.f32 %v127, 0.0
    %v137 = vmax.f32 %v131, 0.0
    %v138 = vmax.f32 %v133, 0.0
    %v139 = vld [vmem:[%s3] sm:$0xff]
    %v140 = vld [vmem:[%s3 + $0x8] sm:$0xff]
    %v141 = vld [vmem:[%s3 + $0x10] sm:$0xff]
    %v142 = vld [vmem:[%s3 + $0x18] sm:$0xff]
    %v143 = vld [vmem:[%s3 + $0x20] sm:$0xff]
    %v144 = vld [vmem:[%s3 + $0x28] sm:$0xff]
    %v145 = vld [vmem:[%s3 + $0x30] sm:$0xff]
    %v146 = vld [vmem:[%s3 + $0x38] sm:$0xff]
    %v147 = vld [vmem:[%s3 + $0x40] sm:$0xff]
    %v148 = vld [vmem:[%s3 + $0x48] sm:$0xff]
    %v149 = vld [vmem:[%s3 + $0x50] sm:$0xff]
    %v150 = vld [vmem:[%s3 + $0x58] sm:$0xff]
    %v151 = vld [vmem:[%s3 + $0x60] sm:$0xff]
    %v152 = vld [vmem:[%s3 + $0x68] sm:$0xff]
    %v153 = vld [vmem:[%s3 + $0x70] sm:$0xff]
    %v154 = vld [vmem:[%s3 + $0x78] sm:$0xff]
    %v155 = vld [vmem:[%s3 + $0x80] sm:$0xff]
    %v156 = vld [vmem:[%s3 + $0x88] sm:$0xff]
    %v157 = vld [vmem:[%s3 + $0x90] sm:$0xff]
    %v158 = vld [vmem:[%s3 + $0x98] sm:$0xff]
    %v159 = vld [vmem:[%s3 + $0xa0] sm:$0xff]
    %v160 = vld [vmem:[%s3 + $0xa8] sm:$0xff]
    %v161 = vld [vmem:[%s3 + $0xb0] sm:$0xff]
    %v162 = vld [vmem:[%s3 + $0xb8] sm:$0xff]
    %v163 = vld [vmem:[%s3 + $0xc0] sm:$0xff]
    %v164 = vld [vmem:[%s3 + $0xc8] sm:$0xff]
    %v165 = vld [vmem:[%s3 + $0xd0] sm:$0xff]
    %v166 = vld [vmem:[%s3 + $0xd8] sm:$0xff]
    %v167 = vld [vmem:[%s3 + $0xe0] sm:$0xff]
    %v168 = vld [vmem:[%s3 + $0xe8] sm:$0xff]
    %v169 = vld [vmem:[%s3 + $0xf0] sm:$0xff]
    %v170 = vld [vmem:[%s3 + $0xf8] sm:$0xff]
    %v171 = vld [vmem:[%s4] sm:$0x1]
    %v173 = vlaneseq
    %v174 = vshrl.u32 %v173, 7
    %v175 = vsub.s32 0, %v174
    %v176 = vrot.slane %v171, %v175
    %178 = vmatprep.subr.mxu0 0.0
    %179 = vmatpush1.msra.mxu0 %v139
    %180 = vmatprep.subr.mxu0 0.0
    %181 = vmatpush1.msra.mxu0 %v140
    %182 = vmatprep.subr.mxu0 0.0
    %183 = vmatpush1.msra.mxu0 %v141
    %184 = vmatprep.subr.mxu0 0.0
    %185 = vmatpush1.msra.mxu0 %v142
    %186 = vmatprep.subr.mxu0 0.0
    %187 = vmatpush1.msra.mxu0 %v143
    %188 = vmatprep.subr.mxu0 0.0
    %189 = vmatpush1.msra.mxu0 %v144
    %190 = vmatprep.subr.mxu0 0.0
    %191 = vmatpush1.msra.mxu0 %v145
    %192 = vmatprep.subr.mxu0 0.0
    %193 = vmatpush1.msra.mxu0 %v146
    %194 = vmatprep.subr.mxu0 0.0
    %195 = vmatpush1.msra.mxu0 %v147
    %196 = vmatprep.subr.mxu0 0.0
    %197 = vmatpush1.msra.mxu0 %v148
    %198 = vmatprep.subr.mxu0 0.0
    %199 = vmatpush1.msra.mxu0 %v149
    %200 = vmatprep.subr.mxu0 0.0
    %201 = vmatpush1.msra.mxu0 %v150
    %202 = vmatprep.subr.mxu0 0.0
    %203 = vmatpush1.msra.mxu0 %v151
    %204 = vmatprep.subr.mxu0 0.0
    %205 = vmatpush1.msra.mxu0 %v152
    %206 = vmatprep.subr.mxu0 0.0
    %207 = vmatpush1.msra.mxu0 %v153
    %208 = vmatprep.subr.mxu0 0.0
    %209 = vmatpush1.msra.mxu0 %v154
    %210 = vmatprep.subr.mxu0 0.0
    %211 = vmatpush1.msra.mxu0 %v155
    %212 = vmatprep.subr.mxu0 0.0
    %213 = vmatpush1.msra.mxu0 %v156
    %214 = vmatprep.subr.mxu0 0.0
    %215 = vmatpush1.msra.mxu0 %v157
    %216 = vmatprep.subr.mxu0 0.0
    %217 = vmatpush1.msra.mxu0 %v158
    %218 = vmatprep.subr.mxu0 0.0
    %219 = vmatpush1.msra.mxu0 %v159
    %220 = vmatprep.subr.mxu0 0.0
    %221 = vmatpush1.msra.mxu0 %v160
    %222 = vmatprep.subr.mxu0 0.0
    %223 = vmatpush1.msra.mxu0 %v161
    %224 = vmatprep.subr.mxu0 0.0
    %225 = vmatpush1.msra.mxu0 %v162
    %226 = vmatprep.subr.mxu0 0.0
    %227 = vmatpush1.msra.mxu0 %v163
    %228 = vmatprep.subr.mxu0 0.0
    %229 = vmatpush1.msra.mxu0 %v164
    %230 = vmatprep.subr.mxu0 0.0
    %231 = vmatpush1.msra.mxu0 %v165
    %232 = vmatprep.subr.mxu0 0.0
    %233 = vmatpush1.msra.mxu0 %v166
    %234 = vmatprep.subr.mxu0 0.0
    %235 = vmatpush1.msra.mxu0 %v167
    %236 = vmatprep.subr.mxu0 0.0
    %237 = vmatpush1.msra.mxu0 %v168
    %238 = vmatprep.subr.mxu0 0.0
    %239 = vmatpush1.msra.mxu0 %v169
    %240 = vmatprep.subr.mxu0 0.0
    %241 = vmatpush1.msra.mxu0 %v170
    %242 = vmatprep.mubr.f32.mxu0 %v136
    %243 = vmatmul.mubr.f32.gmra.mrb[0].mxu0 %v135
    %v244 = vpop.f32.mrb[0].mxu0
    %v245 = vadd.f32 %v176, %v244
    %v246 = vpop.f32.mrb[0].mxu0
    %247 = vmatprep.mubr.f32.mxu0 %v138
    %248 = vmatmul.mubr.f32.gmra.mrb[0].mxu0 %v137
    %v249 = vpop.f32.mrb[0].mxu0
    %v250 = vadd.f32 %v176, %v249
    %v251 = vpop.f32.mrb[0].mxu0
    %252 = vdwg.mxu0
    %253 = vst.msk [vmem:[#allocation2] sm:$0xff] %vm51, %v245
    %254 = vst.msk [vmem:[#allocation2 + $0x8] sm:$0xff] %vm51, %v250
    // Predicated region
    $region22: #{tpu_custom_call.1} parent=1 // pred_check
      _
    $region23: #{tpu_custom_call.1} parent=1 // pred_check_branch
      %256 = sbr.rel (0) target = $region25
    $region24: #{tpu_custom_call.1} parent=1 // pred_region
      %s258 = ssub.s32 256, 256
      %259 = vsyncadd [#allocation3], %s258
      %s260 = sshll.u32 [#allocation2], 4
      %s261 = int_to_ptr.vmem [resolvable:$true] %s260
      %266 = dma.vmem_to_hbm [thread:$0]  %s261, 256, %s5, [#allocation3], 128, 128, 8
    $region25: #{tpu_custom_call.1} parent=1 // pred_fallthru
      _
    // Predicated region
    $region26: #{tpu_custom_call.1} parent=1 // pred_check
      _
    $region27: #{tpu_custom_call.1} parent=1 // pred_check_branch
      %268 = sbr.rel (0) target = $region29
    $region28: #{tpu_custom_call.1} parent=1 // pred_region
      %269 = dma.done [#allocation3], 256
    $region29: #{tpu_custom_call.1} parent=1 // pred_fallthru
      _
    %270 = vsyncpa [#allocation3], 1

</llo_original>
